<compile_context>
chip_gen: v7x
topology: tpu7x:2x2x1
jax: 0.10.0
libtpu: 0.0.40
codegen_flags: <defaults>
</compile_context>

<pallas_src>
import functools

import jax
import jax.numpy as jnp
from jax.experimental import pallas as pl
from jax.experimental.pallas import tpu as pltpu


def _round_up(n, m):
    return ((n + m - 1) // m) * m


def _largest_dividing_tile(requested, total, quantum=128):
    """Largest multiple of `quantum` that divides `total` and is <= requested."""
    requested = min(requested, total)
    best = quantum
    t = quantum
    while t <= requested:
        if total % t == 0:
            best = t
        t += quantum
    return best


def _device_tiles():
    """Per-generation (tm, tn, tk, vmem_limit_bytes)."""
    try:
        kind = jax.devices()[0].device_kind.lower()
    except Exception:  # pragma: no cover - defensive
        kind = ""
    if "v6" in kind:
        # Needs ~675 flop/byte to saturate the MXU -> very large tiles,
        # ~32 MiB working set; raise the scoped VMEM limit well above it.
        return 2048, 1024, 512, 100 << 20
    if "v7" in kind or "7x" in kind:
        # Only 64 MiB VMEM per TC but 3.2 TB/s HBM: moderate tiles suffice.
        return 1024, 512, 512, 48 << 20
    if "v5" in kind:
        # Balance ~240 flop/byte; 512-tiles (~341 flop/byte) cross roofline.
        return 512, 512, 512, 64 << 20
    return 512, 512, 512, 64 << 20


def _glu_kernel(x_ref, w1_ref, b1_ref, w2_ref, b2_ref, o_ref, acc1_ref, acc2_ref):
    k = pl.program_id(2)

    @pl.when(k == 0)
    def _init():
        # Fold the bias into the accumulator init: added exactly once per
        # output tile; frees a VALU add in the hot loop.
        acc1_ref[...] = jnp.broadcast_to(
            b1_ref[...].astype(jnp.float32), acc1_ref.shape)
        acc2_ref[...] = jnp.broadcast_to(
            b2_ref[...].astype(jnp.float32), acc2_ref.shape)

    x = x_ref[...]
    acc1_ref[...] += jnp.dot(x, w1_ref[...], preferred_element_type=jnp.float32)
    acc2_ref[...] += jnp.dot(x, w2_ref[...], preferred_element_type=jnp.float32)

    @pl.when(k == pl.num_programs(2) - 1)
    def _finalize():
        h1 = acc1_ref[...]
        h2 = acc2_ref[...]
        # sigmoid(h1) = 1 / (1 + exp(-h1)); exp and the reciprocal both land
        # on the EUP slot, keeping the epilogue off the VALU critical path.
        gate = pl.reciprocal(1.0 + jnp.exp(-h1), approx=True)
        o_ref[...] = (gate * h2).astype(o_ref.dtype)


def prepare_glu_params(w1_t, b1, w2_t, b2, compute_dtype=jnp.bfloat16):
    """One-time weight prep (hoisted out of the per-call path).

    w*_t: (D, D) linear weights in (in, out) layout (PyTorch weight transposed).
    b*:   (D,)
    Returns bf16 weights and f32 biases zero-padded to a 128-multiple feature dim.
    """
    D = w1_t.shape[0]
    d_pad = _round_up(D, 128)
    pad2 = ((0, d_pad - D), (0, d_pad - D))
    w1_p = jnp.pad(w1_t.astype(compute_dtype), pad2)
    w2_p = jnp.pad(w2_t.astype(compute_dtype), pad2)
    b1_p = jnp.pad(b1.astype(jnp.float32), (0, d_pad - D)).reshape(1, d_pad)
    b2_p = jnp.pad(b2.astype(jnp.float32), (0, d_pad - D)).reshape(1, d_pad)
    return w1_p, b1_p, w2_p, b2_p


@functools.partial(jax.jit,
                   static_argnames=("tm", "tn", "tk", "vmem_limit_bytes"))
def _glu_pallas_impl(x, w1_p, b1_p, w2_p, b2_p, *, tm, tn, tk, vmem_limit_bytes):
    orig_shape = x.shape
    D = orig_shape[-1]
    d_pad = w1_p.shape[0]
    out_dtype = x.dtype
    compute_dtype = w1_p.dtype

    x2d = x.reshape(-1, D)
    N = x2d.shape[0]

    # Feature / contraction tiles: largest 128-multiples that divide d_pad
    # (no over-padding of D beyond the 128 round-up done at prep time).
    tn = _largest_dividing_tile(tn, d_pad)
    tk = _largest_dividing_tile(tk, d_pad)

    # Row tile: clamp to a multiple of 16 for tiny N (bf16 sublane packing);
    # pad rows instead of asserting divisibility.
    tm = min(tm, _round_up(N, 16))
    n_pad = _round_up(N, tm)

    # If the row grid collapses to a single tile, keep >= 2 output-feature
    # tiles so both TensorCores get work on v7x (harmless elsewhere: N small).
    if n_pad // tm == 1 and d_pad // tn == 1 and d_pad >= 256:
        tn = _largest_dividing_tile(d_pad // 2, d_pad)

    # Only x is cast/padded per call; weights/biases were prepared at init.
    x_p = jnp.pad(x2d.astype(compute_dtype),
                  ((0, n_pad - N), (0, d_pad - D)))

    grid = (n_pad // tm, d_pad // tn, d_pad // tk)

    out = pl.pallas_call(
        _glu_kernel,
        out_shape=jax.ShapeDtypeStruct((n_pad, d_pad), out_dtype),
        grid_spec=pltpu.PrefetchScalarGridSpec(
            num_scalar_prefetch=0,
            grid=grid,
            in_specs=[
                pl.BlockSpec((tm, tk), lambda i, j, k: (i, k)),   # x rows
                pl.BlockSpec((tk, tn), lambda i, j, k: (k, j)),   # W1^T tile
                pl.BlockSpec((1, tn), lambda i, j, k: (0, j)),    # b1 tile
                pl.BlockSpec((tk, tn), lambda i, j, k: (k, j)),   # W2^T tile
                pl.BlockSpec((1, tn), lambda i, j, k: (0, j)),    # b2 tile
            ],
            out_specs=pl.BlockSpec((tm, tn), lambda i, j, k: (i, j)),
            scratch_shapes=[
                pltpu.VMEM((tm, tn), jnp.float32),  # acc for linear_1
                pltpu.VMEM((tm, tn), jnp.float32),  # acc for linear_2
            ],
        ),
        compiler_params=pltpu.CompilerParams(
            dimension_semantics=("parallel", "parallel", "arbitrary"),
            vmem_limit_bytes=vmem_limit_bytes),
    )(x_p, w1_p, b1_p, w2_p, b2_p)

    return out[:N, :D].reshape(orig_shape)


def glu_pallas(x, w1_p, b1_p, w2_p, b2_p, *, tm=None, tn=None, tk=None,
               vmem_limit_bytes=None):
    """GLU: sigmoid(x @ W1^T + b1) * (x @ W2^T + b2) with prepared params."""
    dtm, dtn, dtk, dvmem = _device_tiles()
    return _glu_pallas_impl(
        x, w1_p, b1_p, w2_p, b2_p,
        tm=tm or dtm, tn=tn or dtn, tk=tk or dtk,
        vmem_limit_bytes=vmem_limit_bytes or dvmem)


def init_glu_params(key, dimension, dtype=jnp.float32):
    """Deterministic synthetic init matching nn.Linear(dimension, dimension)."""
    k1, k2, k3, k4 = jax.random.split(key, 4)
    bound = 1.0 / (dimension ** 0.5)
    # PyTorch weight shape is (out, in); store transposed (in, out) for x @ W.
    w1 = jax.random.uniform(k1, (dimension, dimension), dtype, -bound, bound)
    b1 = jax.random.uniform(k2, (dimension,), dtype, -bound, bound)
    w2 = jax.random.uniform(k3, (dimension, dimension), dtype, -bound, bound)
    b2 = jax.random.uniform(k4, (dimension,), dtype, -bound, bound)
    return w1.T, b1, w2.T, b2


def glu_reference(x, w1_t, b1, w2_t, b2):
    h1 = x @ w1_t + b1
    h2 = x @ w2_t + b2
    return jax.nn.sigmoid(h1) * h2


if __name__ == "__main__":
    key = jax.random.PRNGKey(0)
    dimension = 32
    batch, seq = 2, 8  # x: (2, 8, 32) -> flattened to (16, 32) rows

    kx, kp = jax.random.split(key)
    x = jax.random.normal(kx, (batch, seq, dimension), jnp.float32)
    w1_t, b1, w2_t, b2 = init_glu_params(kp, dimension)

    # One-time weight prep (cast + pad), hoisted out of the per-call path.
    w1_p, b1_p, w2_p, b2_p = prepare_glu_params(w1_t, b1, w2_t, b2)

    out = glu_pallas(x, w1_p, b1_p, w2_p, b2_p)
    out = jax.block_until_ready(out)
    assert out.shape == x.shape

    # Reference computed from the same bf16-rounded inputs (the kernel's
    # intentional compute dtype), f32 accumulation.
    xr = x.astype(jnp.bfloat16).astype(jnp.float32)
    w1r = w1_t.astype(jnp.bfloat16).astype(jnp.float32)
    w2r = w2_t.astype(jnp.bfloat16).astype(jnp.float32)
    ref = glu_reference(xr, w1r, b1, w2r, b2)
    assert jnp.allclose(out, ref, atol=5e-3, rtol=5e-3), "mismatch vs reference"

    # Also sanity-check against the pure-f32 reference with a looser tolerance
    # (difference is only the bf16 cast of inputs/weights).
    ref_f32 = glu_reference(x, w1_t, b1, w2_t, b2)
    assert jnp.allclose(out, ref_f32, atol=3e-2, rtol=3e-2), "f32 ref mismatch"

    print("KERNEL_OK")
</pallas_src>

<mosaic_0001>
module attributes {stable_mosaic.version = 11 : i64} {
  func.func @_glu_kernel(%arg0: i32, %arg1: i32, %arg2: i32, %arg3: memref<16x128xbf16, #tpu.memory_space<vmem>>, %arg4: memref<128x128xbf16, #tpu.memory_space<vmem>>, %arg5: memref<1x128xf32, #tpu.memory_space<vmem>>, %arg6: memref<128x128xbf16, #tpu.memory_space<vmem>>, %arg7: memref<1x128xf32, #tpu.memory_space<vmem>>, %arg8: memref<16x128xf32, #tpu.memory_space<vmem>>, %arg9: memref<16x128xf32, #tpu.memory_space<vmem>>, %arg10: memref<16x128xf32, #tpu.memory_space<vmem>>) attributes {dimension_semantics = [#tpu.dimension_semantics<parallel>, #tpu.dimension_semantics<parallel>, #tpu.dimension_semantics<arbitrary>], iteration_bounds = array<i64: 1, 1, 1>, scalar_prefetch = 0 : i64, scratch_operands = 2 : i64, tpu.core_type = #tpu.core_type<tc>, window_params = [{transform_indices = @transform_0, window_bounds = array<i64: 16, 128>}, {transform_indices = @transform_1, window_bounds = array<i64: 128, 128>}, {transform_indices = @transform_2, window_bounds = array<i64: 1, 128>}, {transform_indices = @transform_3, window_bounds = array<i64: 128, 128>}, {transform_indices = @transform_4, window_bounds = array<i64: 1, 128>}, {transform_indices = @transform_5, window_bounds = array<i64: 16, 128>}]} {
    %c0_i32 = arith.constant 0 : i32
    %0 = arith.cmpi eq, %arg2, %c0_i32 : i32
    %1 = arith.extui %0 : i1 to i32
    %c0_i32_0 = arith.constant 0 : i32
    %2 = arith.cmpi ne, %1, %c0_i32_0 : i32
    scf.if %2 {
      %c0_17 = arith.constant 0 : index
      %c0_18 = arith.constant 0 : index
      %17 = vector.load %arg5[%c0_17, %c0_18] : memref<1x128xf32, #tpu.memory_space<vmem>>, vector<1x128xf32>
      %18 = vector.shape_cast %17 : vector<1x128xf32> to vector<1x128xf32>
      %19 = vector.broadcast %18 : vector<1x128xf32> to vector<16x128xf32>
      %c0_19 = arith.constant 0 : index
      %c0_20 = arith.constant 0 : index
      %20 = vector.load %arg9[%c0_19, %c0_20] : memref<16x128xf32, #tpu.memory_space<vmem>>, vector<16x128xf32>
      tpu.vector_store %arg9[%c0_19, %c0_20], %19 {strides = array<i32>} : memref<16x128xf32, #tpu.memory_space<vmem>>, vector<16x128xf32>,
      %c0_21 = arith.constant 0 : index
      %c0_22 = arith.constant 0 : index
      %21 = vector.load %arg7[%c0_21, %c0_22] : memref<1x128xf32, #tpu.memory_space<vmem>>, vector<1x128xf32>
      %22 = vector.shape_cast %21 : vector<1x128xf32> to vector<1x128xf32>
      %23 = vector.broadcast %22 : vector<1x128xf32> to vector<16x128xf32>
      %c0_23 = arith.constant 0 : index
      %c0_24 = arith.constant 0 : index
      %24 = vector.load %arg10[%c0_23, %c0_24] : memref<16x128xf32, #tpu.memory_space<vmem>>, vector<16x128xf32>
      tpu.vector_store %arg10[%c0_23, %c0_24], %23 {strides = array<i32>} : memref<16x128xf32, #tpu.memory_space<vmem>>, vector<16x128xf32>,
    } else {
    }
    %c0 = arith.constant 0 : index
    %c0_1 = arith.constant 0 : index
    %3 = vector.load %arg3[%c0, %c0_1] : memref<16x128xbf16, #tpu.memory_space<vmem>>, vector<16x128xbf16>
    %c0_2 = arith.constant 0 : index
    %c0_3 = arith.constant 0 : index
    %4 = vector.load %arg9[%c0_2, %c0_3] : memref<16x128xf32, #tpu.memory_space<vmem>>, vector<16x128xf32>
    %c0_4 = arith.constant 0 : index
    %c0_5 = arith.constant 0 : index
    %5 = vector.load %arg4[%c0_4, %c0_5] : memref<128x128xbf16, #tpu.memory_space<vmem>>, vector<128x128xbf16>
    %cst = arith.constant dense<0.000000e+00> : vector<16x128xf32>
    %6 = tpu.matmul %3, %5, %cst {dimension_numbers = #tpu.dot_dimension_numbers<[1], [0], [0], [1], [0, 0, 1, 1], [], []>} : vector<16x128xbf16>, vector<128x128xbf16>, vector<16x128xf32> -> vector<16x128xf32>
    %7 = arith.addf %4, %6 : vector<16x128xf32>
    %c0_6 = arith.constant 0 : index
    %c0_7 = arith.constant 0 : index
    %8 = vector.load %arg9[%c0_6, %c0_7] : memref<16x128xf32, #tpu.memory_space<vmem>>, vector<16x128xf32>
    tpu.vector_store %arg9[%c0_6, %c0_7], %7 {strides = array<i32>} : memref<16x128xf32, #tpu.memory_space<vmem>>, vector<16x128xf32>,
    %c0_8 = arith.constant 0 : index
    %c0_9 = arith.constant 0 : index
    %9 = vector.load %arg10[%c0_8, %c0_9] : memref<16x128xf32, #tpu.memory_space<vmem>>, vector<16x128xf32>
    %c0_10 = arith.constant 0 : index
    %c0_11 = arith.constant 0 : index
    %10 = vector.load %arg6[%c0_10, %c0_11] : memref<128x128xbf16, #tpu.memory_space<vmem>>, vector<128x128xbf16>
    %cst_12 = arith.constant dense<0.000000e+00> : vector<16x128xf32>
    %11 = tpu.matmul %3, %10, %cst_12 {dimension_numbers = #tpu.dot_dimension_numbers<[1], [0], [0], [1], [0, 0, 1, 1], [], []>} : vector<16x128xbf16>, vector<128x128xbf16>, vector<16x128xf32> -> vector<16x128xf32>
    %12 = arith.addf %9, %11 : vector<16x128xf32>
    %c0_13 = arith.constant 0 : index
    %c0_14 = arith.constant 0 : index
    %13 = vector.load %arg10[%c0_13, %c0_14] : memref<16x128xf32, #tpu.memory_space<vmem>>, vector<16x128xf32>
    tpu.vector_store %arg10[%c0_13, %c0_14], %12 {strides = array<i32>} : memref<16x128xf32, #tpu.memory_space<vmem>>, vector<16x128xf32>,
    %c0_i32_15 = arith.constant 0 : i32
    %14 = arith.cmpi eq, %arg2, %c0_i32_15 : i32
    %15 = arith.extui %14 : i1 to i32
    %c0_i32_16 = arith.constant 0 : i32
    %16 = arith.cmpi ne, %15, %c0_i32_16 : i32
    scf.if %16 {
      %c0_17 = arith.constant 0 : index
      %c0_18 = arith.constant 0 : index
      %17 = vector.load %arg9[%c0_17, %c0_18] : memref<16x128xf32, #tpu.memory_space<vmem>>, vector<16x128xf32>
      %c0_19 = arith.constant 0 : index
      %c0_20 = arith.constant 0 : index
      %18 = vector.load %arg10[%c0_19, %c0_20] : memref<16x128xf32, #tpu.memory_space<vmem>>, vector<16x128xf32>
      %cst_21 = arith.constant 0.000000e+00 : f32
      %19 = vector.broadcast %cst_21 : f32 to vector<16x128xf32>
      %20 = arith.subf %19, %17 : vector<16x128xf32>
      %21 = math.exp %20 : vector<16x128xf32>
      %cst_22 = arith.constant 1.000000e+00 : f32
      %22 = vector.broadcast %cst_22 : f32 to vector<16x128xf32>
      %23 = arith.addf %22, %21 : vector<16x128xf32>
      %24 = tpu.reciprocal %23 {approx = true} : vector<16x128xf32> -> vector<16x128xf32>
      %25 = arith.mulf %24, %18 : vector<16x128xf32>
      %c0_23 = arith.constant 0 : index
      %c0_24 = arith.constant 0 : index
      %26 = vector.load %arg8[%c0_23, %c0_24] : memref<16x128xf32, #tpu.memory_space<vmem>>, vector<16x128xf32>
      tpu.vector_store %arg8[%c0_23, %c0_24], %25 {strides = array<i32>} : memref<16x128xf32, #tpu.memory_space<vmem>>, vector<16x128xf32>,
    } else {
    }
    return
  }
  func.func @transform_0(%arg0: i32, %arg1: i32, %arg2: i32) -> (i32, i32) {
    %c0_i32 = arith.constant 0 : i32
    return %arg0, %arg2 : i32, i32
  }
  func.func @transform_1(%arg0: i32, %arg1: i32, %arg2: i32) -> (i32, i32) {
    %c0_i32 = arith.constant 0 : i32
    return %arg2, %arg1 : i32, i32
  }
  func.func @transform_2(%arg0: i32, %arg1: i32, %arg2: i32) -> (i32, i32) {
    %c0_i32 = arith.constant 0 : i32
    %c0_i32_0 = arith.constant 0 : i32
    return %c0_i32, %arg1 : i32, i32
  }
  func.func @transform_3(%arg0: i32, %arg1: i32, %arg2: i32) -> (i32, i32) {
    %c0_i32 = arith.constant 0 : i32
    return %arg2, %arg1 : i32, i32
  }
  func.func @transform_4(%arg0: i32, %arg1: i32, %arg2: i32) -> (i32, i32) {
    %c0_i32 = arith.constant 0 : i32
    %c0_i32_0 = arith.constant 0 : i32
    return %c0_i32, %arg1 : i32, i32
  }
  func.func @transform_5(%arg0: i32, %arg1: i32, %arg2: i32) -> (i32, i32) {
    %c0_i32 = arith.constant 0 : i32
    return %arg0, %arg1 : i32, i32
  }
}

</mosaic_0001>

<llo_original>
// kernel: _glu_pallas_impl.1
$region0: #{_glu_pallas_impl.1}
  #allocation0 [shape = 'u32[]', space=smem, size = 0x4, offset = 0x4, fixed_abs, tag = 'smem constant byte address 0x4 - core index']
  #allocation1 [shape = 'u32[144,128]{1,0:T(1,128)}', space=vmem, size = 0x12000, scoped, tag = 'internal scratch']
  #allocation2 [shape = 'f32[16,128]{1,0:T(8,128)}', space=vmem, size = 0x2000, scoped, tag = 'scratch operand']
  #allocation3 [shape = 'f32[16,128]{1,0:T(8,128)}', space=vmem, size = 0x2000, scoped, tag = 'scratch operand']
  %s0 = inlined_call_operand.hbm [shape: bf16[16,128], index: 0, kind: input, shape index: {}]
  %s1 = inlined_call_operand.hbm [shape: bf16[128,128], index: 1, kind: input, shape index: {}]
  %s2 = inlined_call_operand.hbm [shape: f32[1,128], index: 2, kind: input, shape index: {}]
  %s3 = inlined_call_operand.hbm [shape: bf16[128,128], index: 3, kind: input, shape index: {}]
  %s4 = inlined_call_operand.hbm [shape: f32[1,128], index: 4, kind: input, shape index: {}]
  %s5 = inlined_call_operand.hbm [shape: f32[16,128], index: 5, kind: output, shape index: {}]
  %s6 = sld [smem:[#allocation0]]
  $region58: #{_glu_pallas_impl.1} parent=0
    _
  %s8 = ssub.s32 1, %s6
  %s9 = scalar_select 0, %s8, %s6
  $region1: #{_glu_pallas_impl.1} parent=0
    #allocation4 [shape = 'u8[4096]{0}', space=vmem, size = 0x1000, scoped, tag = 'input window, operand 0, single buffered']
    #allocation5 [shape = 's32[1]{0}', space=sflag, size = 0x4, scoped, tag = 'scoped memory for _glu_pallas_impl.1']
    #allocation6 [shape = 's32[1]{0}', space=sflag, size = 0x4, scoped, tag = 'scoped memory for _glu_pallas_impl.1']
    #allocation7 [shape = 'u8[32768]{0}', space=vmem, size = 0x8000, scoped, tag = 'input window, operand 1, single buffered']
    #allocation8 [shape = 's32[1]{0}', space=sflag, size = 0x4, scoped, tag = 'scoped memory for _glu_pallas_impl.1']
    #allocation9 [shape = 'u8[512]{0}', space=vmem, size = 0x400, scoped, tag = 'input window, operand 2, single buffered']
    #allocation10 [shape = 'u8[32768]{0}', space=vmem, size = 0x8000, scoped, tag = 'input window, operand 3, single buffered']
    #allocation11 [shape = 's32[1]{0}', space=sflag, size = 0x4, scoped, tag = 'scoped memory for _glu_pallas_impl.1']
    #allocation12 [shape = 'u8[512]{0}', space=vmem, size = 0x400, scoped, tag = 'input window, operand 4, single buffered']
    #allocation13 [shape = 'u8[8192]{0}', space=vmem, size = 0x2000, scoped, tag = 'output window, operand 0, single buffered']
    %10 = vsyncpa [#allocation5], 0
    %11 = vsyncpa [#allocation8], 0
    %12 = vsyncpa [#allocation11], 0
    %13 = vsyncpa [#allocation6], 0
    // Predicated region
    $region2: #{_glu_pallas_impl.1} parent=1 // pred_check
      _
    $region3: #{_glu_pallas_impl.1} parent=1 // pred_check_branch
      %15 = sbr.rel (0) target = $region5
    $region4: #{_glu_pallas_impl.1} parent=1 // pred_region
      %s17 = ssub.s32 128, 128
      %18 = vsyncadd [#allocation5], %s17
      %s19 = sshll.u32 [#allocation4], 4
      %s20 = int_to_ptr.vmem [resolvable:$true] %s19
      %25 = dma.hbm_to_vmem [thread:$0]  %s0, 128, %s20, [#allocation5], 64, 64, 4
    $region5: #{_glu_pallas_impl.1} parent=1 // pred_fallthru
      _
    // Predicated region
    $region6: #{_glu_pallas_impl.1} parent=1 // pred_check
      _
    $region7: #{_glu_pallas_impl.1} parent=1 // pred_check_branch
      %27 = sbr.rel (0) target = $region9
    $region8: #{_glu_pallas_impl.1} parent=1 // pred_region
      %s29 = ssub.s32 1024, 1024
      %30 = vsyncadd [#allocation8], %s29
      %s31 = sshll.u32 [#allocation7], 4
      %s32 = int_to_ptr.vmem [resolvable:$true] %s31
      %37 = dma.hbm_to_vmem [thread:$0]  %s1, 1024, %s32, [#allocation8], 64, 64, 4
    $region9: #{_glu_pallas_impl.1} parent=1 // pred_fallthru
      _
    // Predicated region
    $region10: #{_glu_pallas_impl.1} parent=1 // pred_check
      _
    $region11: #{_glu_pallas_impl.1} parent=1 // pred_check_branch
      %39 = sbr.rel (0) target = $region13
    $region12: #{_glu_pallas_impl.1} parent=1 // pred_region
      %s41 = ssub.s32 16, 16
      %42 = vsyncadd [#allocation8], %s41
      %s44 = sshll.u32 [#allocation9], 4
      %s45 = int_to_ptr.vmem [resolvable:$true] %s44
      %47 = dma.hbm_to_vmem [thread:$0]  %s2, 16, %s45, [#allocation8]
    $region13: #{_glu_pallas_impl.1} parent=1 // pred_fallthru
      _
    // Predicated region
    $region14: #{_glu_pallas_impl.1} parent=1 // pred_check
      _
    $region15: #{_glu_pallas_impl.1} parent=1 // pred_check_branch
      %49 = sbr.rel (0) target = $region17
    $region16: #{_glu_pallas_impl.1} parent=1 // pred_region
      %s51 = ssub.s32 1024, 1024
      %52 = vsyncadd [#allocation11], %s51
      %s53 = sshll.u32 [#allocation10], 4
      %s54 = int_to_ptr.vmem [resolvable:$true] %s53
      %59 = dma.hbm_to_vmem [thread:$0]  %s3, 1024, %s54, [#allocation11], 64, 64, 4
    $region17: #{_glu_pallas_impl.1} parent=1 // pred_fallthru
      _
    // Predicated region
    $region18: #{_glu_pallas_impl.1} parent=1 // pred_check
      _
    $region19: #{_glu_pallas_impl.1} parent=1 // pred_check_branch
      %61 = sbr.rel (0) target = $region21
    $region20: #{_glu_pallas_impl.1} parent=1 // pred_region
      %s63 = ssub.s32 16, 16
      %64 = vsyncadd [#allocation11], %s63
      %s66 = sshll.u32 [#allocation12], 4
      %s67 = int_to_ptr.vmem [resolvable:$true] %s66
      %69 = dma.hbm_to_vmem [thread:$0]  %s4, 16, %s67, [#allocation11]
    $region21: #{_glu_pallas_impl.1} parent=1 // pred_fallthru
      _
    // Predicated region
    $region22: #{_glu_pallas_impl.1} parent=1 // pred_check
      _
    $region23: #{_glu_pallas_impl.1} parent=1 // pred_check_branch
      %71 = sbr.rel (0) target = $region25
    $region24: #{_glu_pallas_impl.1} parent=1 // pred_region
      %72 = dma.done [#allocation5], 128
    $region25: #{_glu_pallas_impl.1} parent=1 // pred_fallthru
      _
    // Predicated region
    $region26: #{_glu_pallas_impl.1} parent=1 // pred_check
      _
    $region27: #{_glu_pallas_impl.1} parent=1 // pred_check_branch
      %74 = sbr.rel (0) target = $region29
    $region28: #{_glu_pallas_impl.1} parent=1 // pred_region
      %75 = dma.done [#allocation8], 1024
    $region29: #{_glu_pallas_impl.1} parent=1 // pred_fallthru
      _
    // Predicated region
    $region30: #{_glu_pallas_impl.1} parent=1 // pred_check
      _
    $region31: #{_glu_pallas_impl.1} parent=1 // pred_check_branch
      %77 = sbr.rel (0) target = $region33
    $region32: #{_glu_pallas_impl.1} parent=1 // pred_region
      %78 = dma.done [#allocation8], 16
    $region33: #{_glu_pallas_impl.1} parent=1 // pred_fallthru
      _
    // Predicated region
    $region34: #{_glu_pallas_impl.1} parent=1 // pred_check
      _
    $region35: #{_glu_pallas_impl.1} parent=1 // pred_check_branch
      %80 = sbr.rel (0) target = $region37
    $region36: #{_glu_pallas_impl.1} parent=1 // pred_region
      %81 = dma.done [#allocation11], 1024
    $region37: #{_glu_pallas_impl.1} parent=1 // pred_fallthru
      _
    // Predicated region
    $region38: #{_glu_pallas_impl.1} parent=1 // pred_check
      _
    $region39: #{_glu_pallas_impl.1} parent=1 // pred_check_branch
      %83 = sbr.rel (0) target = $region41
    $region40: #{_glu_pallas_impl.1} parent=1 // pred_region
      %84 = dma.done [#allocation11], 16
    $region41: #{_glu_pallas_impl.1} parent=1 // pred_fallthru
      _
    %p86 = scmp.eq.s32.totalorder 0, 0
    // Predicated region
    $region42: #{_glu_pallas_impl.1} parent=1 // pred_check
      %p87 = pneg %p86
    $region43: #{_glu_pallas_impl.1} parent=1 // pred_check_branch
      %89 = sbr.rel (%p87) target = $region45
    $region44: #{_glu_pallas_impl.1} parent=1 // pred_region
      %v90 = vld [vmem:[#allocation9] sm:$0x1]
      %v92 = vlaneseq
      %v93 = vshrl.u32 %v92, 7
      %v94 = vsub.s32 0, %v93
      %v95 = vrot.slane %v90, %v94
      %97 = vst [vmem:[#allocation2] sm:$0xff] %v95
      %98 = vst [vmem:[#allocation2 + $0x8] sm:$0xff] %v95
      %v99 = vld [vmem:[#allocation12] sm:$0x1]
      %v101 = vlaneseq
      %v102 = vshrl.u32 %v101, 7
      %v103 = vsub.s32 0, %v102
      %v104 = vrot.slane %v99, %v103
      %106 = vst [vmem:[#allocation3] sm:$0xff] %v104
      %107 = vst [vmem:[#allocation3 + $0x8] sm:$0xff] %v104
    $region45: #{_glu_pallas_impl.1} parent=1 // pred_fallthru
      _
    %v108 = vld [vmem:[#allocation4] sm:$0xf]
    %v109 = vld [vmem:[#allocation4 + $0x4] sm:$0xf]
    %v110 = vld [vmem:[#allocation2] sm:$0xff]
    %v111 = vld [vmem:[#allocation2 + $0x8] sm:$0xff]
    %v112 = vld [vmem:[#allocation7] sm:$0xf]
    %v113 = vld [vmem:[#allocation7 + $0x4] sm:$0xf]
    %v114 = vld [vmem:[#allocation7 + $0x8] sm:$0xf]
    %v115 = vld [vmem:[#allocation7 + $0xc] sm:$0xf]
    %v116 = vld [vmem:[#allocation7 + $0x10] sm:$0xf]
    %v117 = vld [vmem:[#allocation7 + $0x14] sm:$0xf]
    %v118 = vld [vmem:[#allocation7 + $0x18] sm:$0xf]
    %v119 = vld [vmem:[#allocation7 + $0x1c] sm:$0xf]
    %v120 = vld [vmem:[#allocation7 + $0x20] sm:$0xf]
    %v121 = vld [vmem:[#allocation7 + $0x24] sm:$0xf]
    %v122 = vld [vmem:[#allocation7 + $0x28] sm:$0xf]
    %v123 = vld [vmem:[#allocation7 + $0x2c] sm:$0xf]
    %v124 = vld [vmem:[#allocation7 + $0x30] sm:$0xf]
    %v125 = vld [vmem:[#allocation7 + $0x34] sm:$0xf]
    %v126 = vld [vmem:[#allocation7 + $0x38] sm:$0xf]
    %v127 = vld [vmem:[#allocation7 + $0x3c] sm:$0xf]
    %v130 = vunpack.c.l.b16 %v108
    %v131 = vunpack.c.l.b16 %v109
    %v132 = vpack.c.b16 %v131, %v130
    %v150 = vunpack.c.l.b16 %v112
    %v151 = vunpack.c.l.b16 %v113
    %v152 = vunpack.c.l.b16 %v114
    %v153 = vunpack.c.l.b16 %v115
    %v154 = vunpack.c.l.b16 %v116
    %v155 = vunpack.c.l.b16 %v117
    %v156 = vunpack.c.l.b16 %v118
    %v157 = vunpack.c.l.b16 %v119
    %v158 = vunpack.c.l.b16 %v120
    %v159 = vunpack.c.l.b16 %v121
    %v160 = vunpack.c.l.b16 %v122
    %v161 = vunpack.c.l.b16 %v123
    %v162 = vunpack.c.l.b16 %v124
    %v163 = vunpack.c.l.b16 %v125
    %v164 = vunpack.c.l.b16 %v126
    %v165 = vunpack.c.l.b16 %v127
    %v166 = vpack.c.b16 %v151, %v150
    %v167 = vpack.c.b16 %v153, %v152
    %v168 = vpack.c.b16 %v155, %v154
    %v169 = vpack.c.b16 %v157, %v156
    %v170 = vpack.c.b16 %v159, %v158
    %v171 = vpack.c.b16 %v161, %v160
    %v172 = vpack.c.b16 %v163, %v162
    %v173 = vpack.c.b16 %v165, %v164
    %182 = vmatprep.subr.bf16.mxu0 0
    %183 = vmatpush1.bf16.msra.mxu0 %v166
    %184 = vmatprep.subr.bf16.mxu0 0
    %185 = vmatpush1.bf16.msra.mxu0 %v167
    %186 = vmatprep.subr.bf16.mxu0 0
    %187 = vmatpush1.bf16.msra.mxu0 %v168
    %188 = vmatprep.subr.bf16.mxu0 0
    %189 = vmatpush1.bf16.msra.mxu0 %v169
    %190 = vmatprep.subr.bf16.mxu0 0
    %191 = vmatpush1.bf16.msra.mxu0 %v170
    %192 = vmatprep.subr.bf16.mxu0 0
    %193 = vmatpush1.bf16.msra.mxu0 %v171
    %194 = vmatprep.subr.bf16.mxu0 0
    %195 = vmatpush1.bf16.msra.mxu0 %v172
    %196 = vmatprep.subr.bf16.mxu0 0
    %197 = vmatpush1.bf16.msra.mxu0 %v173
    %198 = vmatprep.subr.bf16.mxu0 0
    %199 = vmatpush1.bf16.msra.mxu0 0
    %200 = vmatprep.subr.bf16.mxu0 0
    %201 = vmatpush1.bf16.msra.mxu0 0
    %202 = vmatprep.subr.bf16.mxu0 0
    %203 = vmatpush1.bf16.msra.mxu0 0
    %204 = vmatprep.subr.bf16.mxu0 0
    %205 = vmatpush1.bf16.msra.mxu0 0
    %206 = vmatprep.subr.bf16.mxu0 0
    %207 = vmatpush1.bf16.msra.mxu0 0
    %208 = vmatprep.subr.bf16.mxu0 0
    %209 = vmatpush1.bf16.msra.mxu0 0
    %210 = vmatprep.subr.bf16.mxu0 0
    %211 = vmatpush1.bf16.msra.mxu0 0
    %212 = vmatprep.subr.bf16.mxu0 0
    %213 = vmatpush1.bf16.msra.mxu0 0
    %214 = vmatprep.mubr.bf16.mxu0 0
    %215 = vmatmul.mubr.bf16.gmra.mrb[0].mxu0 %v132
    %v216 = vpop.f32.mrb[0].mxu0
    %v217 = vadd.f32 0.0, %v216
    %v218 = vpop.f32.mrb[0].mxu0
    %v219 = vpop.f32.mrb[0].mxu0
    %v220 = vadd.f32 0.0, %v219
    %v221 = vpop.f32.mrb[0].mxu0
    %222 = vdwg.mxu0
    %v223 = vadd.f32 %v110, %v217
    %v224 = vadd.f32 %v111, %v220
    %225 = vst [vmem:[#allocation2] sm:$0xff] %v223
    %226 = vst [vmem:[#allocation2 + $0x8] sm:$0xff] %v224
    %v227 = vld [vmem:[#allocation3] sm:$0xff]
    %v228 = vld [vmem:[#allocation3 + $0x8] sm:$0xff]
    %v229 = vld [vmem:[#allocation10] sm:$0xf]
    %v230 = vld [vmem:[#allocation10 + $0x4] sm:$0xf]
    %v231 = vld [vmem:[#allocation10 + $0x8] sm:$0xf]
    %v232 = vld [vmem:[#allocation10 + $0xc] sm:$0xf]
    %v233 = vld [vmem:[#allocation10 + $0x10] sm:$0xf]
    %v234 = vld [vmem:[#allocation10 + $0x14] sm:$0xf]
    %v235 = vld [vmem:[#allocation10 + $0x18] sm:$0xf]
    %v236 = vld [vmem:[#allocation10 + $0x1c] sm:$0xf]
    %v237 = vld [vmem:[#allocation10 + $0x20] sm:$0xf]
    %v238 = vld [vmem:[#allocation10 + $0x24] sm:$0xf]
    %v239 = vld [vmem:[#allocation10 + $0x28] sm:$0xf]
    %v240 = vld [vmem:[#allocation10 + $0x2c] sm:$0xf]
    %v241 = vld [vmem:[#allocation10 + $0x30] sm:$0xf]
    %v242 = vld [vmem:[#allocation10 + $0x34] sm:$0xf]
    %v243 = vld [vmem:[#allocation10 + $0x38] sm:$0xf]
    %v244 = vld [vmem:[#allocation10 + $0x3c] sm:$0xf]
    %v261 = vunpack.c.l.b16 %v229
    %v262 = vunpack.c.l.b16 %v230
    %v263 = vunpack.c.l.b16 %v231
    %v264 = vunpack.c.l.b16 %v232
    %v265 = vunpack.c.l.b16 %v233
    %v266 = vunpack.c.l.b16 %v234
    %v267 = vunpack.c.l.b16 %v235
    %v268 = vunpack.c.l.b16 %v236
    %v269 = vunpack.c.l.b16 %v237
    %v270 = vunpack.c.l.b16 %v238
    %v271 = vunpack.c.l.b16 %v239
    %v272 = vunpack.c.l.b16 %v240
    %v273 = vunpack.c.l.b16 %v241
    %v274 = vunpack.c.l.b16 %v242
    %v275 = vunpack.c.l.b16 %v243
    %v276 = vunpack.c.l.b16 %v244
    %v277 = vpack.c.b16 %v262, %v261
    %v278 = vpack.c.b16 %v264, %v263
    %v279 = vpack.c.b16 %v266, %v265
    %v280 = vpack.c.b16 %v268, %v267
    %v281 = vpack.c.b16 %v270, %v269
    %v282 = vpack.c.b16 %v272, %v271
    %v283 = vpack.c.b16 %v274, %v273
    %v284 = vpack.c.b16 %v276, %v275
    %293 = vmatprep.subr.bf16.mxu0 0
    %294 = vmatpush1.bf16.msra.mxu0 %v277
    %295 = vmatprep.subr.bf16.mxu0 0
    %296 = vmatpush1.bf16.msra.mxu0 %v278
    %297 = vmatprep.subr.bf16.mxu0 0
    %298 = vmatpush1.bf16.msra.mxu0 %v279
    %299 = vmatprep.subr.bf16.mxu0 0
    %300 = vmatpush1.bf16.msra.mxu0 %v280
    %301 = vmatprep.subr.bf16.mxu0 0
    %302 = vmatpush1.bf16.msra.mxu0 %v281
    %303 = vmatprep.subr.bf16.mxu0 0
    %304 = vmatpush1.bf16.msra.mxu0 %v282
    %305 = vmatprep.subr.bf16.mxu0 0
    %306 = vmatpush1.bf16.msra.mxu0 %v283
    %307 = vmatprep.subr.bf16.mxu0 0
    %308 = vmatpush1.bf16.msra.mxu0 %v284
    %309 = vmatprep.subr.bf16.mxu0 0
    %310 = vmatpush1.bf16.msra.mxu0 0
    %311 = vmatprep.subr.bf16.mxu0 0
    %312 = vmatpush1.bf16.msra.mxu0 0
    %313 = vmatprep.subr.bf16.mxu0 0
    %314 = vmatpush1.bf16.msra.mxu0 0
    %315 = vmatprep.subr.bf16.mxu0 0
    %316 = vmatpush1.bf16.msra.mxu0 0
    %317 = vmatprep.subr.bf16.mxu0 0
    %318 = vmatpush1.bf16.msra.mxu0 0
    %319 = vmatprep.subr.bf16.mxu0 0
    %320 = vmatpush1.bf16.msra.mxu0 0
    %321 = vmatprep.subr.bf16.mxu0 0
    %322 = vmatpush1.bf16.msra.mxu0 0
    %323 = vmatprep.subr.bf16.mxu0 0
    %324 = vmatpush1.bf16.msra.mxu0 0
    %325 = vmatprep.mubr.bf16.mxu0 0
    %326 = vmatmul.mubr.bf16.gmra.mrb[0].mxu0 %v132
    %v327 = vpop.f32.mrb[0].mxu0
    %v328 = vadd.f32 0.0, %v327
    %v329 = vpop.f32.mrb[0].mxu0
    %v330 = vpop.f32.mrb[0].mxu0
    %v331 = vadd.f32 0.0, %v330
    %v332 = vpop.f32.mrb[0].mxu0
    %333 = vdwg.mxu0
    %v334 = vadd.f32 %v227, %v328
    %v335 = vadd.f32 %v228, %v331
    %336 = vst [vmem:[#allocation3] sm:$0xff] %v334
    %337 = vst [vmem:[#allocation3 + $0x8] sm:$0xff] %v335
    // Predicated region
    $region46: #{_glu_pallas_impl.1} parent=1 // pred_check
      %p338 = pneg %p86
    $region47: #{_glu_pallas_impl.1} parent=1 // pred_check_branch
      %340 = sbr.rel (%p338) target = $region49
    $region48: #{_glu_pallas_impl.1} parent=1 // pred_region
      %v341 = vld [vmem:[#allocation2] sm:$0xff]
      %v342 = vld [vmem:[#allocation2 + $0x8] sm:$0xff]
      %v343 = vld [vmem:[#allocation3] sm:$0xff]
      %v344 = vld [vmem:[#allocation3 + $0x8] sm:$0xff]
      %v345 = vsub.f32 0.0, %v341
      %v346 = vsub.f32 0.0, %v342
      %v347 = vmul.f32 %v345, 1.442695
      %v348 = vpow.pop %v347
      %v349 = vmul.f32 %v346, 1.442695
      %v350 = vpow.pop %v349
      %v351 = vadd.f32 %v348, 1.0
      %v352 = vadd.f32 %v350, 1.0
      %v353 = vrcp.pop %v351
      %v354 = vrcp.pop %v352
      %v355 = vmul.f32 %v353, %v343
      %v356 = vmul.f32 %v354, %v344
      %357 = vst [vmem:[#allocation13] sm:$0xff] %v355
      %358 = vst [vmem:[#allocation13 + $0x8] sm:$0xff] %v356
    $region49: #{_glu_pallas_impl.1} parent=1 // pred_fallthru
      _
    // Predicated region
    $region50: #{_glu_pallas_impl.1} parent=1 // pred_check
      _
    $region51: #{_glu_pallas_impl.1} parent=1 // pred_check_branch
      %360 = sbr.rel (0) target = $region53
    $region52: #{_glu_pallas_impl.1} parent=1 // pred_region
      %s362 = ssub.s32 256, 256
      %363 = vsyncadd [#allocation6], %s362
      %s364 = sshll.u32 [#allocation13], 4
      %s365 = int_to_ptr.vmem [resolvable:$true] %s364
      %370 = dma.vmem_to_hbm [thread:$0]  %s365, 256, %s5, [#allocation6], 128, 128, 8
    $region53: #{_glu_pallas_impl.1} parent=1 // pred_fallthru
      _
    // Predicated region
    $region54: #{_glu_pallas_impl.1} parent=1 // pred_check
      _
    $region55: #{_glu_pallas_impl.1} parent=1 // pred_check_branch
      %372 = sbr.rel (0) target = $region57
    $region56: #{_glu_pallas_impl.1} parent=1 // pred_region
      %373 = dma.done [#allocation6], 256
    $region57: #{_glu_pallas_impl.1} parent=1 // pred_fallthru
      _
    %374 = vsyncpa [#allocation5], 1
    %375 = vsyncpa [#allocation8], 1
    %376 = vsyncpa [#allocation11], 1
    %377 = vsyncpa [#allocation6], 1

</llo_original>
